<compile_context>
chip_gen: v5e
topology: v5e:2x2
jax: 0.10.0
libtpu: 0.0.40
codegen_flags: <defaults>
</compile_context>

<pallas_src>
import functools

import jax
import jax.numpy as jnp
from jax import lax
from jax.experimental import pallas as pl
from jax.experimental.pallas import tpu as pltpu


def _round_up(x, m):
    return (x + m - 1) // m * m


def _simple_nn_kernel(nchunks, chunk,
                      x_ref, w1_ref, b1_ref, alpha_ref, w2_ref, b2_ref, o_ref):
    """One batch tile.

    x_ref  : (tb, 10)  input tile in its native torch layout (f32 or bf16)
    w1_ref : (20, 10)  linear1.weight (torch layout), resident in VMEM
    b1_ref : (20, 1)   linear1.bias as a column (broadcasts over lanes)
    alpha  : (1, 1)    PReLU weight, SMEM scalar
    w2_ref : (1, 20)   linear2.weight, resident in VMEM
    b2_ref : (1, 1)    linear2.bias, SMEM scalar
    o_ref  : (1, tb)   sigmoid output, lane-dense (batch in the lane axis)
    """
    w1 = w1_ref[...]
    if w1.dtype != x_ref.dtype:
        # bf16 input -> bf16 MXU operands (accumulation stays f32 below).
        w1 = w1.astype(x_ref.dtype)
    b1 = b1_ref[...]                     # (20, 1), broadcasts over lanes
    w2 = w2_ref[...]                     # (1, 20)
    a = alpha_ref[0, 0]
    b2 = b2_ref[0, 0]

    def body(c, carry):
        off = pl.multiple_of(c * chunk, chunk)
        xc = x_ref[pl.ds(off, chunk), :]                       # (chunk, 10)

        # linear1 as w1 @ xc^T (contract both last dims): the batch stays in
        # the lane dimension, the flip happens on the MXU path, and the hidden
        # activation (20, chunk) lives in vregs only.
        h = lax.dot_general(w1, xc, (((1,), (1,)), ((), ())),
                            preferred_element_type=jnp.float32)  # (20, chunk)
        h = h + b1

        # PReLU: max(h, a*h) == where(h > 0, h, a*h) for a <= 1 (default 0.25).
        # TODO(synk): switch back to jnp.where if a trained alpha can exceed 1.
        h = jnp.maximum(h, a * h)

        # linear2: (1, 20) @ (20, chunk) -> (1, chunk)
        y = jnp.dot(w2, h, preferred_element_type=jnp.float32) + b2

        # sigmoid (exp + reciprocal route to the EUP); lane-dense aligned store.
        o_ref[:, pl.ds(off, chunk)] = jax.nn.sigmoid(y)
        return carry

    lax.fori_loop(0, nchunks, body, 0,
                  unroll=True if nchunks <= 16 else 8)


@functools.partial(jax.jit, static_argnames=("tile_b", "chunk"))
def simple_nn_forward(x, w1, b1, alpha, w2, b2, *, tile_b=None, chunk=512):
    """x: (B, 10) f32 or bf16.  Returns (B, 1) f32, matching SimpleNN.forward."""
    B, F = x.shape
    assert F == 10, x.shape
    itemsize = jnp.dtype(x.dtype).itemsize

    # ---- layout / tiling decisions (all static under jit) -----------------
    # In-kernel lane chunk (batch rows per inner step): multiple of 128 lanes.
    chunk = max(128, _round_up(chunk, 128))

    # Pad only to the 128-lane quantum, and only when the batch is ragged —
    # aligned batches are consumed in place (no extra HBM read+write pass).
    b_pad = _round_up(max(B, 1), 128)
    x_in = x if b_pad == B else jnp.pad(x, ((0, b_pad - B), (0, 0)))
    chunk = min(chunk, b_pad)            # b_pad is a multiple of 128

    # Default batch tile: size the double-buffered, lane-padded (tb, 10->128)
    # x window to ~16 MiB total so the whole working set stays inside the
    # explicit VMEM limit on every generation (v5e's default scope is 16 MiB).
    if tile_b is None:
        tile_b = (8 * 1024 * 1024) // (128 * itemsize)   # 16384 f32 / 32768 bf16

    # Tile: a multiple of `chunk`, capped by tile_b, never larger than the
    # padded batch, and split so the "parallel" grid axis has >= 2 steps
    # whenever possible (v7x shards grid steps across its 2 TensorCores).
    max_tb = (b_pad // chunk) * chunk                    # >= chunk
    want = min(_round_up(tile_b, chunk),
               _round_up(pl.cdiv(b_pad, 2), chunk))
    tb = max(chunk, min(want, max_tb))
    grid = pl.cdiv(b_pad, tb)
    nchunks = tb // chunk

    # VMEM budget: lane-padded x tile (tb, 10->128) and sublane-padded output
    # tile (1->8, tb), both double-buffered, plus slack for small temporaries.
    x_tile_bytes = tb * 128 * itemsize
    out_tile_bytes = 8 * tb * 4
    vmem_limit = int(min(max(2 * (x_tile_bytes + out_tile_bytes) + (4 << 20),
                             24 << 20),
                         48 << 20))

    smem_scalar = pl.BlockSpec(memory_space=pltpu.MemorySpace.SMEM)

    out = pl.pallas_call(
        functools.partial(_simple_nn_kernel, nchunks, chunk),
        out_shape=jax.ShapeDtypeStruct((1, b_pad), jnp.float32),
        grid=(grid,),
        in_specs=[
            pl.BlockSpec((tb, 10), lambda i: (i, 0)),   # x tile (pipelined)
            pl.BlockSpec((20, 10), lambda i: (0, 0)),   # w1 (resident)
            pl.BlockSpec((20, 1), lambda i: (0, 0)),    # b1 (resident)
            smem_scalar,                                # alpha (SMEM scalar)
            pl.BlockSpec((1, 20), lambda i: (0, 0)),    # w2 (resident)
            smem_scalar,                                # b2 (SMEM scalar)
        ],
        out_specs=pl.BlockSpec((1, tb), lambda i: (0, i)),
        compiler_params=pltpu.CompilerParams(
            dimension_semantics=("parallel",),
            vmem_limit_bytes=vmem_limit),
    )(x_in, w1, b1, alpha, w2, b2)

    # (1, b_pad) -> (B, 1): same contiguous element order, negligible traffic.
    return out[0, :B].reshape(B, 1)


def init_params(key):
    """Deterministic init mimicking torch defaults (uniform(-1/sqrt(fan_in), .))."""
    k1, k2, k3, k4 = jax.random.split(key, 4)
    in1, out1 = 10, 20
    in2, out2 = 20, 1
    bound1 = 1.0 / (in1 ** 0.5)
    bound2 = 1.0 / (in2 ** 0.5)
    # torch layouts: weight (out, in); biases kept as columns for broadcasting.
    w1 = jax.random.uniform(k1, (out1, in1), jnp.float32, -bound1, bound1)
    b1 = jax.random.uniform(k2, (out1, 1), jnp.float32, -bound1, bound1)
    w2 = jax.random.uniform(k3, (out2, in2), jnp.float32, -bound2, bound2)
    b2 = jax.random.uniform(k4, (out2, 1), jnp.float32, -bound2, bound2)
    alpha = jnp.full((1, 1), 0.25, jnp.float32)    # nn.PReLU() default
    return w1, b1, alpha, w2, b2


def reference_forward(x, w1, b1, alpha, w2, b2):
    h = x @ w1.T + b1[:, 0]
    h = jnp.where(h > 0, h, alpha[0, 0] * h)
    y = h @ w2.T + b2[:, 0]
    return jax.nn.sigmoid(y)


if __name__ == "__main__":
    key = jax.random.PRNGKey(0)
    kx, kp = jax.random.split(key)
    params = init_params(kp)

    # Primary small test (B = 8): module's (batch, 10) input, f32.
    x8 = jax.random.normal(kx, (8, 10), jnp.float32)
    out8 = jax.block_until_ready(simple_nn_forward(x8, *params))
    ref8 = reference_forward(x8, *params)
    assert out8.shape == (8, 1), out8.shape
    assert jnp.allclose(out8, ref8, atol=2e-5, rtol=1e-4)

    # Ragged batch exercising multiple pipelined grid steps + a partial block.
    x300 = jax.random.normal(jax.random.fold_in(kx, 1), (300, 10), jnp.float32)
    out300 = jax.block_until_ready(
        simple_nn_forward(x300, *params, tile_b=128, chunk=128))
    ref300 = reference_forward(x300, *params)
    assert out300.shape == (300, 1), out300.shape
    assert jnp.allclose(out300, ref300, atol=2e-5, rtol=1e-4)

    # bf16 input path (bandwidth mode): >=2 grid steps, bf16 MXU with f32 acc.
    x1k = jax.random.normal(jax.random.fold_in(kx, 2), (1024, 10), jnp.float32)
    x1k_bf = x1k.astype(jnp.bfloat16)
    out1k = jax.block_until_ready(simple_nn_forward(x1k_bf, *params))
    ref1k = reference_forward(x1k_bf.astype(jnp.float32), *params)
    assert out1k.shape == (1024, 1), out1k.shape
    assert jnp.allclose(out1k, ref1k, atol=1e-2, rtol=1e-2)

    print("KERNEL_OK")
</pallas_src>

<mosaic_0001>
module attributes {stable_mosaic.version = 11 : i64} {
  func.func @_simple_nn_kernel(%arg0: i32, %arg1: memref<128x10xf32, #tpu.memory_space<vmem>>, %arg2: memref<20x10xf32, #tpu.memory_space<vmem>>, %arg3: memref<20x1xf32, #tpu.memory_space<vmem>>, %arg4: memref<1x1xf32, #tpu.memory_space<smem>>, %arg5: memref<1x20xf32, #tpu.memory_space<vmem>>, %arg6: memref<1x1xf32, #tpu.memory_space<smem>>, %arg7: memref<1x128xf32, #tpu.memory_space<vmem>>) attributes {dimension_semantics = [#tpu.dimension_semantics<parallel>], iteration_bounds = array<i64: 1>, scalar_prefetch = 0 : i64, scratch_operands = 0 : i64, tpu.core_type = #tpu.core_type<tc>, window_params = [{transform_indices = @transform_0, window_bounds = array<i64: 128, 10>}, {pipeline_mode = #tpu.pipeline_mode<synchronous>, transform_indices = @transform_1, window_bounds = array<i64: 20, 10>}, {pipeline_mode = #tpu.pipeline_mode<synchronous>, transform_indices = @transform_2, window_bounds = array<i64: 20, 1>}, {transform_indices = @transform_3, window_bounds = array<i64: 1, 1>}, {pipeline_mode = #tpu.pipeline_mode<synchronous>, transform_indices = @transform_4, window_bounds = array<i64: 1, 20>}, {transform_indices = @transform_5, window_bounds = array<i64: 1, 1>}, {transform_indices = @transform_6, window_bounds = array<i64: 1, 128>}]} {
    %c0 = arith.constant 0 : index
    %c0_0 = arith.constant 0 : index
    %0 = vector.load %arg2[%c0, %c0_0] : memref<20x10xf32, #tpu.memory_space<vmem>>, vector<20x10xf32>
    %c0_1 = arith.constant 0 : index
    %c0_2 = arith.constant 0 : index
    %1 = vector.load %arg3[%c0_1, %c0_2] : memref<20x1xf32, #tpu.memory_space<vmem>>, vector<20x1xf32>
    %c0_3 = arith.constant 0 : index
    %c0_4 = arith.constant 0 : index
    %2 = vector.load %arg5[%c0_3, %c0_4] : memref<1x20xf32, #tpu.memory_space<vmem>>, vector<1x20xf32>
    %c0_5 = arith.constant 0 : index
    %c0_6 = arith.constant 0 : index
    %3 = memref.load %arg4[%c0_5, %c0_6] : memref<1x1xf32, #tpu.memory_space<smem>>
    %c0_7 = arith.constant 0 : index
    %c0_8 = arith.constant 0 : index
    %4 = memref.load %arg6[%c0_7, %c0_8] : memref<1x1xf32, #tpu.memory_space<smem>>
    %c0_i32 = arith.constant 0 : i32
    %c128_i32 = arith.constant 128 : i32
    %5 = arith.muli %c0_i32, %c128_i32 : i32
    %6 = tpu.assume_multiple %5, 128 : i32
    %7 = arith.index_cast %6 : i32 to index
    %c0_9 = arith.constant 0 : index
    %8 = vector.load %arg1[%7, %c0_9] : memref<128x10xf32, #tpu.memory_space<vmem>>, vector<128x10xf32>
    %cst = arith.constant dense<0.000000e+00> : vector<20x128xf32>
    %9 = tpu.matmul %0, %8, %cst {dimension_numbers = #tpu.dot_dimension_numbers<[1], [1], [0], [0], [0, 0, 1, 0], [], []>} : vector<20x10xf32>, vector<128x10xf32>, vector<20x128xf32> -> vector<20x128xf32>
    %10 = vector.broadcast %1 : vector<20x1xf32> to vector<20x128xf32>
    %11 = arith.addf %9, %10 : vector<20x128xf32>
    %12 = vector.broadcast %3 : f32 to vector<20x128xf32>
    %13 = arith.mulf %12, %11 : vector<20x128xf32>
    %14 = arith.maximumf %11, %13 : vector<20x128xf32>
    %cst_10 = arith.constant dense<0.000000e+00> : vector<1x128xf32>
    %15 = tpu.matmul %2, %14, %cst_10 {dimension_numbers = #tpu.dot_dimension_numbers<[1], [0], [0], [1], [0, 0, 1, 1], [], []>} : vector<1x20xf32>, vector<20x128xf32>, vector<1x128xf32> -> vector<1x128xf32>
    %16 = vector.broadcast %4 : f32 to vector<1x128xf32>
    %17 = arith.addf %15, %16 : vector<1x128xf32>
    %18 = arith.negf %17 : vector<1x128xf32>
    %19 = math.exp %18 : vector<1x128xf32>
    %cst_11 = arith.constant 1.000000e+00 : f32
    %20 = vector.broadcast %cst_11 : f32 to vector<1x128xf32>
    %21 = arith.addf %20, %19 : vector<1x128xf32>
    %22 = arith.divf %20, %21 : vector<1x128xf32>
    %c0_12 = arith.constant 0 : index
    %23 = arith.index_cast %6 : i32 to index
    %24 = vector.load %arg7[%c0_12, %23] : memref<1x128xf32, #tpu.memory_space<vmem>>, vector<1x128xf32>
    tpu.vector_store %arg7[%c0_12, %23], %22 {strides = array<i32>} : memref<1x128xf32, #tpu.memory_space<vmem>>, vector<1x128xf32>,
    %c1_i32 = arith.constant 1 : i32
    return
  }
  func.func @transform_0(%arg0: i32) -> (i32, i32) {
    %c0_i32 = arith.constant 0 : i32
    %c0_i32_0 = arith.constant 0 : i32
    return %arg0, %c0_i32 : i32, i32
  }
  func.func @transform_1(%arg0: i32) -> (i32, i32) {
    %c0_i32 = arith.constant 0 : i32
    %c0_i32_0 = arith.constant 0 : i32
    %c0_i32_1 = arith.constant 0 : i32
    return %c0_i32, %c0_i32_0 : i32, i32
  }
  func.func @transform_2(%arg0: i32) -> (i32, i32) {
    %c0_i32 = arith.constant 0 : i32
    %c0_i32_0 = arith.constant 0 : i32
    %c0_i32_1 = arith.constant 0 : i32
    return %c0_i32, %c0_i32_0 : i32, i32
  }
  func.func @transform_3(%arg0: i32) -> (i32, i32) {
    %c0_i32 = arith.constant 0 : i32
    %c0_i32_0 = arith.constant 0 : i32
    %c0_i32_1 = arith.constant 0 : i32
    return %c0_i32, %c0_i32_0 : i32, i32
  }
  func.func @transform_4(%arg0: i32) -> (i32, i32) {
    %c0_i32 = arith.constant 0 : i32
    %c0_i32_0 = arith.constant 0 : i32
    %c0_i32_1 = arith.constant 0 : i32
    return %c0_i32, %c0_i32_0 : i32, i32
  }
  func.func @transform_5(%arg0: i32) -> (i32, i32) {
    %c0_i32 = arith.constant 0 : i32
    %c0_i32_0 = arith.constant 0 : i32
    %c0_i32_1 = arith.constant 0 : i32
    return %c0_i32, %c0_i32_0 : i32, i32
  }
  func.func @transform_6(%arg0: i32) -> (i32, i32) {
    %c0_i32 = arith.constant 0 : i32
    %c0_i32_0 = arith.constant 0 : i32
    return %c0_i32, %arg0 : i32, i32
  }
}

</mosaic_0001>

<llo_original>
// kernel: simple_nn_forward.1
$region0: #{simple_nn_forward.1}
  #allocation0 [shape = 'u32[]', space=smem, size = 0x4, offset = 0x4, fixed_abs, tag = 'smem constant byte address 0x4 - core index']
  #allocation1 [shape = 'u32[72,128]{1,0:T(1,128)}', space=vmem, size = 0x9000, scoped, tag = 'internal scratch']
  #allocation2 [shape = 'f32[1,1]{1,0:T(1,128)S(6)}', space=smem, size = 0x200, scoped, tag = 'scoped memory for simple_nn_forward.1']
  #allocation3 [shape = 'f32[1,1]{1,0:T(1,128)S(6)}', space=smem, size = 0x200, scoped, tag = 'scoped memory for simple_nn_forward.1']
  %s0 = inlined_call_operand.vmem [shape: f32[128,10], index: 0, kind: input, shape index: {}]
  %s1 = inlined_call_operand.vmem [shape: f32[20,10], index: 1, kind: input, shape index: {}]
  %s2 = inlined_call_operand.vmem [shape: f32[20,1], index: 2, kind: input, shape index: {}]
  %s3 = inlined_call_operand.<no memory space> [shape: f32[1,1], index: 3, kind: input, shape index: {}]
  %s4 = inlined_call_operand.vmem [shape: f32[1,20], index: 4, kind: input, shape index: {}]
  %s5 = inlined_call_operand.<no memory space> [shape: f32[1,1], index: 5, kind: input, shape index: {}]
  %s6 = inlined_call_operand.vmem [shape: f32[1,128], index: 6, kind: output, shape index: {}]
  %s7 = sld [smem:[#allocation0]]
  $region34: #{simple_nn_forward.1} parent=0
    _
  %s9 = ssub.s32 1, %s7
  %s10 = scalar_select 0, %s9, %s7
  %11 = sst [smem:[#allocation2]] %s3
  %12 = sst [smem:[#allocation3]] %s5
  // Predicated region
  $region2: #{simple_nn_forward.1} parent=0 // pred_check
    _
  $region3: #{simple_nn_forward.1} parent=0 // pred_check_branch
    %14 = sbr.rel (0) target = $region5
  $region4: #{simple_nn_forward.1} parent=0 // pred_region
    _
  $region5: #{simple_nn_forward.1} parent=0 // pred_fallthru
    _
  // Predicated region
  $region6: #{simple_nn_forward.1} parent=0 // pred_check
    _
  $region7: #{simple_nn_forward.1} parent=0 // pred_check_branch
    %16 = sbr.rel (0) target = $region9
  $region8: #{simple_nn_forward.1} parent=0 // pred_region
    _
  $region9: #{simple_nn_forward.1} parent=0 // pred_fallthru
    _
  // Predicated region
  $region10: #{simple_nn_forward.1} parent=0 // pred_check
    _
  $region11: #{simple_nn_forward.1} parent=0 // pred_check_branch
    %18 = sbr.rel (0) target = $region13
  $region12: #{simple_nn_forward.1} parent=0 // pred_region
    _
  $region13: #{simple_nn_forward.1} parent=0 // pred_fallthru
    _
  // Predicated region
  $region14: #{simple_nn_forward.1} parent=0 // pred_check
    _
  $region15: #{simple_nn_forward.1} parent=0 // pred_check_branch
    %20 = sbr.rel (0) target = $region17
  $region16: #{simple_nn_forward.1} parent=0 // pred_region
    _
  $region17: #{simple_nn_forward.1} parent=0 // pred_fallthru
    _
  // Predicated region
  $region18: #{simple_nn_forward.1} parent=0 // pred_check
    _
  $region19: #{simple_nn_forward.1} parent=0 // pred_check_branch
    %22 = sbr.rel (0) target = $region21
  $region20: #{simple_nn_forward.1} parent=0 // pred_region
    _
  $region21: #{simple_nn_forward.1} parent=0 // pred_fallthru
    _
  // Predicated region
  $region22: #{simple_nn_forward.1} parent=0 // pred_check
    _
  $region23: #{simple_nn_forward.1} parent=0 // pred_check_branch
    %24 = sbr.rel (0) target = $region25
  $region24: #{simple_nn_forward.1} parent=0 // pred_region
    _
  $region25: #{simple_nn_forward.1} parent=0 // pred_fallthru
    _
  %v25 = vld [vmem:[%s1] sm:$0xff]
  %v26 = vld [vmem:[%s1 + $0x8] sm:$0xff]
  %v27 = vld [vmem:[%s1 + $0x10] sm:$0xf]
  %v28 = vld [vmem:[%s2] sm:$0xff]
  %v29 = vld [vmem:[%s2 + $0x8] sm:$0xff]
  %v30 = vld [vmem:[%s2 + $0x10] sm:$0xf]
  %v31 = vld [vmem:[%s4] sm:$0x1]
  %s32 = sld [smem:[#allocation2]]
  %s33 = sld [smem:[#allocation3]]
  %v34 = vld [vmem:[%s0] sm:$0xff]
  %v35 = vld [vmem:[%s0 + $0x8] sm:$0xff]
  %v36 = vld [vmem:[%s0 + $0x10] sm:$0xff]
  %v37 = vld [vmem:[%s0 + $0x18] sm:$0xff]
  %v38 = vld [vmem:[%s0 + $0x20] sm:$0xff]
  %v39 = vld [vmem:[%s0 + $0x28] sm:$0xff]
  %v40 = vld [vmem:[%s0 + $0x30] sm:$0xff]
  %v41 = vld [vmem:[%s0 + $0x38] sm:$0xff]
  %v42 = vld [vmem:[%s0 + $0x40] sm:$0xff]
  %v43 = vld [vmem:[%s0 + $0x48] sm:$0xff]
  %v44 = vld [vmem:[%s0 + $0x50] sm:$0xff]
  %v45 = vld [vmem:[%s0 + $0x58] sm:$0xff]
  %v46 = vld [vmem:[%s0 + $0x60] sm:$0xff]
  %v47 = vld [vmem:[%s0 + $0x68] sm:$0xff]
  %v48 = vld [vmem:[%s0 + $0x70] sm:$0xff]
  %v49 = vld [vmem:[%s0 + $0x78] sm:$0xff]
  %51 = vset.pattern.permute.xlu0 0
  %52 = vperm.xlu0 %51, %v28
  %v53 = vpop.permute.xlu0 %52
  %56 = vset.pattern.permute.xlu0 0
  %57 = vperm.xlu0 %56, %v29
  %v58 = vpop.permute.xlu0 %57
  %61 = vset.pattern.permute.xlu0 0
  %62 = vperm.xlu0 %61, %v30
  %v63 = vpop.permute.xlu0 %62
  %vm65 = vcmask 80896
  %v67 = vsel %vm65, %v25, 0
  %v70 = vsel %vm65, %v26, 0
  %v73 = vsel %vm65, %v27, 0
  %v76 = vsel %vm65, %v34, 0
  %v79 = vsel %vm65, %v35, 0
  %v82 = vsel %vm65, %v36, 0
  %v85 = vsel %vm65, %v37, 0
  %v88 = vsel %vm65, %v38, 0
  %v91 = vsel %vm65, %v39, 0
  %v94 = vsel %vm65, %v40, 0
  %v97 = vsel %vm65, %v41, 0
  %v100 = vsel %vm65, %v42, 0
  %v103 = vsel %vm65, %v43, 0
  %v106 = vsel %vm65, %v44, 0
  %v109 = vsel %vm65, %v45, 0
  %v112 = vsel %vm65, %v46, 0
  %v115 = vsel %vm65, %v47, 0
  %v118 = vsel %vm65, %v48, 0
  %v121 = vsel %vm65, %v49, 0
  %123 = vmatpush.xpose.msra.mxu0 %v121
  %124 = vmatpush.xpose.msra.mxu0 %v118
  %125 = vmatpush.xpose.msra.mxu0 %v115
  %126 = vmatpush.xpose.msra.mxu0 %v112
  %127 = vmatpush.xpose.msra.mxu0 %v109
  %128 = vmatpush.xpose.msra.mxu0 %v106
  %129 = vmatpush.xpose.msra.mxu0 %v103
  %130 = vmatpush.xpose.msra.mxu0 %v100
  %131 = vmatpush.xpose.msra.mxu0 %v97
  %132 = vmatpush.xpose.msra.mxu0 %v94
  %133 = vmatpush.xpose.msra.mxu0 %v91
  %134 = vmatpush.xpose.msra.mxu0 %v88
  %135 = vmatpush.xpose.msra.mxu0 %v85
  %136 = vmatpush.xpose.msra.mxu0 %v82
  %137 = vmatpush.xpose.msra.mxu0 %v79
  %138 = vmatpush.xpose.msra.mxu0 %v76
  %139 = vmatmul.f32.gmra.mxu0 %v67
  %v140 = vpop.f32.mrf.mxu0
  %v141 = vadd.f32 %v53, %v140
  %142 = vmatmul.f32.gmra.mxu0 %v70
  %v143 = vpop.f32.mrf.mxu0
  %v144 = vadd.f32 %v58, %v143
  %145 = vmatmul.f32.gmra.mxu0 %v73
  %v146 = vpop.f32.mrf.mxu0
  %v147 = vadd.f32 %v63, %v146
  %148 = vdwg.mxu0
  %v149 = vstv %s32
  %v150 = vmul.f32 %v149, %v141
  %v151 = vmul.f32 %v149, %v144
  %v152 = vmul.f32 %v149, %v147
  %v153 = vmax.f32 %v141, %v150
  %v154 = vmax.f32 %v144, %v151
  %v155 = vmax.f32 %v147, %v152
  %v156 = vstv %s33
  %vm157 = vcmask 162816
  %v159 = vsel %vm157, %v31, 0
  %vm161 = vcmask 1043456
  %v163 = vsel %vm161, %v155, 0
  %165 = vmatpush.msra.mxu0 0.0
  %166 = vmatpush.msra.mxu0 0.0
  %167 = vmatpush.msra.mxu0 0.0
  %168 = vmatpush.msra.mxu0 0.0
  %169 = vmatpush.msra.mxu0 0.0
  %170 = vmatpush.msra.mxu0 0.0
  %171 = vmatpush.msra.mxu0 0.0
  %172 = vmatpush.msra.mxu0 0.0
  %173 = vmatpush.msra.mxu0 0.0
  %174 = vmatpush.msra.mxu0 0.0
  %175 = vmatpush.msra.mxu0 0.0
  %176 = vmatpush.msra.mxu0 0.0
  %177 = vmatpush.msra.mxu0 0.0
  %178 = vmatpush.msra.mxu0 %v163
  %179 = vmatpush.msra.mxu0 %v154
  %180 = vmatpush.msra.mxu0 %v153
  %181 = vmatmul.f32.gmra.mxu0 %v159
  %v182 = vpop.f32.mrf.mxu0
  %v183 = vadd.f32 %v156, %v182
  %184 = vdwg.mxu0
  %v185 = vxor.u32 %v183, 2147483648
  %v186 = vmul.f32 %v185, 1.442695
  %v187 = vpow.pop %v186
  %v188 = vadd.f32 %v187, 1.0
  %v189 = vrcp.pop %v188
  %v190 = vmul.f32 %v188, %v189
  %v191 = vsub.f32 1.0, %v190
  %v192 = vmul.f32 %v189, %v191
  %v193 = vadd.f32 %v189, %v192
  %vm194 = vweird.f32 %v188
  %vm195 = vweird.f32 %v189
  %vm196 = vmor %vm194, %vm195
  %v197 = vsel %vm196, %v189, %v193
  %v198 = vand.u32 2147483647, %v188
  %vm199 = vcmp.eq.f32.partialorder %v198, 8.507059e+37
  %v200 = vand.u32 %v188, 2147483648
  %v201 = vor.u32 1.1754944e-38, %v200
  %v202 = vsel %vm199, %v201, %v197
  %v203 = vmul.f32 1.0, %v202
  %204 = vst [vmem:[%s6] sm:$0x1] %v203
  // Predicated region
  $region26: #{simple_nn_forward.1} parent=0 // pred_check
    _
  $region27: #{simple_nn_forward.1} parent=0 // pred_check_branch
    %206 = sbr.rel (0) target = $region29
  $region28: #{simple_nn_forward.1} parent=0 // pred_region
    _
  $region29: #{simple_nn_forward.1} parent=0 // pred_fallthru
    _
  // Predicated region
  $region30: #{simple_nn_forward.1} parent=0 // pred_check
    _
  $region31: #{simple_nn_forward.1} parent=0 // pred_check_branch
    %208 = sbr.rel (0) target = $region33
  $region32: #{simple_nn_forward.1} parent=0 // pred_region
    _
  $region33: #{simple_nn_forward.1} parent=0 // pred_fallthru
    _

</llo_original>
